<compile_context>
chip_gen: v7x
topology: tpu7x:2x2x1
jax: 0.10.0
libtpu: 0.0.40
codegen_flags: <defaults>
</compile_context>

<pallas_src>
import jax
import jax.numpy as jnp
from jax.experimental import pallas as pl
from jax.experimental.pallas import tpu as pltpu

# Module hyper-parameters (from the PyTorch script)
HIDDEN_SIZE = 2
INPUT_SIZE = 1
NUM_CLASSES = 1
FC1_SIZE = 128
NUM_GATES = 4  # PyTorch gate order: i, f, g, o


def make_lstm_kernel(B, T, H):
    """Builds the single-invocation forward kernel for static (B, T, H)."""
    G = NUM_GATES * H          # packed gate lanes (8)
    L = FC1_SIZE               # 128

    # Row offsets into the fused (R, 128) operand (see pack_operand below).
    x_off = 0
    wx_off = T * B
    b_off = wx_off + 1
    whh_off = b_off + 1
    fc1w_off = whh_off + H
    fc1b_off = fc1w_off + H
    fcw_off = fc1b_off + 1
    fcb_off = fcw_off + 1

    def kernel(pack_ref, out_ref):
        # ---- loop-invariant reads / broadcasts (hoisted once) ---------------
        x_col = pack_ref[x_off:x_off + T * B, 0:1]                   # (T*B, 1)
        wx_row = pack_ref[wx_off:wx_off + 1, 0:G]                    # (1, G)
        b_row = pack_ref[b_off:b_off + 1, 0:G]                       # (1, G)
        whh_b = [jnp.broadcast_to(
                     pack_ref[whh_off + j:whh_off + j + 1, 0:G], (B, G))
                 for j in range(H)]                                  # (B, G) each

        # Hoisted input projection + bias for ALL gates / timesteps:
        #   gx[t*B+b, k*H+m] = x_t[b] * W_ih[k*H+m, 0] + (b_ih+b_hh)[k*H+m]
        gx = x_col * wx_row + b_row                                  # (T*B, G)

        # Per-lane constants folding sigmoid into a single packed tanh:
        #   i/f/o lanes: sigmoid(x) = 0.5 * tanh(0.5*x) + 0.5
        #   g lanes    : tanh(x)
        lane = jax.lax.broadcasted_iota(jnp.int32, (B, G), 1)
        is_g = (lane >= 2 * H) & (lane < 3 * H)
        pre_scale = jnp.where(is_g, 1.0, 0.5)                        # (B, G)
        post_scale = pre_scale
        post_off = jnp.where(is_g, 0.0, 0.5)

        h = jnp.zeros((B, H), jnp.float32)
        c = jnp.zeros((B, H), jnp.float32)

        # ---- recurrence: fully unrolled (T static, small), pure VPU/EUP -----
        # TODO(synk): switch to lax.fori_loop(..., unroll=4..8) if T grows
        # beyond ~32-64 to bound code size and vreg live ranges.
        for t in range(T):
            r = t * B
            rec = gx[r:r + B, :]                                     # (B, G)
            for j in range(H):                                       # 2 FMAs/step
                rec = rec + h[:, j:j + 1] * whh_b[j]
            # single EUP tanh over the packed 8-lane gates
            act = jnp.tanh(rec * pre_scale) * post_scale + post_off  # (B, G)
            i_g = act[:, 0:H]
            f_g = act[:, H:2 * H]
            g_g = act[:, 2 * H:3 * H]
            o_g = act[:, 3 * H:4 * H]
            c = f_g * c + i_g * g_g
            h = o_g * jnp.tanh(c)

        # ---- head: hn -> ReLU -> fc_1 -> ReLU -> fc --------------------------
        hr = jnp.maximum(h, 0.0)                                     # (B, H)
        # fc_1 as H broadcast-FMAs against (1, 128) rows (MXU idle on purpose
        # at B=2; switch to jnp.dot once B >= ~128).
        z = jnp.broadcast_to(pack_ref[fc1b_off:fc1b_off + 1, :], (B, L))
        for j in range(H):
            z = z + hr[:, j:j + 1] * pack_ref[fc1w_off + j:fc1w_off + j + 1, :]
        z = jnp.maximum(z, 0.0)                                      # (B, L)
        # fc as VPU multiply + XLU lane reduction against a (1, 128) row.
        fc_w_row = pack_ref[fcw_off:fcw_off + 1, :]                  # (1, L)
        fc_b = pack_ref[fcb_off:fcb_off + 1, 0:1]                    # (1, 1)
        y = jnp.sum(z * fc_w_row, axis=-1, keepdims=True) + fc_b     # (B, 1)
        out_ref[...] = y.astype(out_ref.dtype)

    return kernel


def pack_operand(x, params):
    """Fuse x and all parameters into one lane-dense (R, 128) f32 array.

    Row layout (T*B = seq*batch rows of x first):
      [0 : T*B)        x, time-major flattened, value in lane 0
      T*B              W_ih packed gate row (lanes 0:8), valid since I == 1
      T*B + 1          combined bias b_ih + b_hh (lanes 0:8)
      [T*B+2 : +H)     W_hh packed rows: row j, lane k*H+m = W_hh[k*H+m, j]
      next H rows      fc_1 weight, transposed (H, 128)
      next row         fc_1 bias (128)
      next row         fc weight as a (1, 128) row
      next row         fc bias in lane 0
    """
    B, T, I = x.shape
    H = HIDDEN_SIZE
    G = NUM_GATES * H
    L = FC1_SIZE

    def pad_lanes(a):
        a = a.astype(jnp.float32)
        return jnp.pad(a, ((0, 0), (0, L - a.shape[1])))

    x_col = jnp.transpose(x, (1, 0, 2)).reshape(T * B, 1)        # time-major
    wx_row = params["w_ih"].reshape(1, G)                        # I == 1
    b_row = (params["b_ih"] + params["b_hh"]).reshape(1, G)
    whh_rows = params["w_hh"].T                                  # (H, G)
    fcb_row = jnp.zeros((1, L), jnp.float32).at[0, 0].set(params["fc_b"][0])

    return jnp.concatenate(
        [pad_lanes(x_col),
         pad_lanes(wx_row),
         pad_lanes(b_row),
         pad_lanes(whh_rows),
         params["fc1_w"].T.astype(jnp.float32),                  # (H, 128)
         params["fc1_b"][None, :].astype(jnp.float32),           # (1, 128)
         params["fc_w"].astype(jnp.float32),                     # (1, 128)
         fcb_row],
        axis=0)


def lstm_module_forward(x, params):
    """x: (B, T, I) float32, batch_first like the PyTorch module."""
    B, T, I = x.shape
    assert I == INPUT_SIZE == 1, "packing assumes input_size == 1"

    pack = pack_operand(x, params)
    vmem = pl.BlockSpec(memory_space=pltpu.MemorySpace.VMEM)

    # NOTE(perf): a single grid-less invocation is right at B=2 / T=8.  If the
    # batch grows, add a batch grid axis with
    # dimension_semantics=("parallel",) so v7x's two TensorCores split it, and
    # move fc_1 onto the MXU once B >= ~128.
    return pl.pallas_call(
        make_lstm_kernel(B, T, HIDDEN_SIZE),
        out_shape=jax.ShapeDtypeStruct((B, NUM_CLASSES), jnp.float32),
        in_specs=[vmem],
        out_specs=vmem,
    )(pack)


def init_params(key):
    """Deterministic synthetic params, PyTorch-style uniform(-k, k) init."""
    ks = jax.random.split(key, 8)
    k_lstm = 1.0 / jnp.sqrt(HIDDEN_SIZE)
    k_fc1 = 1.0 / jnp.sqrt(HIDDEN_SIZE)
    k_fc = 1.0 / jnp.sqrt(FC1_SIZE)
    u = lambda k, shape, bound: jax.random.uniform(
        k, shape, jnp.float32, -bound, bound)
    return {
        "w_ih": u(ks[0], (4 * HIDDEN_SIZE, INPUT_SIZE), k_lstm),
        "w_hh": u(ks[1], (4 * HIDDEN_SIZE, HIDDEN_SIZE), k_lstm),
        "b_ih": u(ks[2], (4 * HIDDEN_SIZE,), k_lstm),
        "b_hh": u(ks[3], (4 * HIDDEN_SIZE,), k_lstm),
        "fc1_w": u(ks[4], (FC1_SIZE, HIDDEN_SIZE), k_fc1),
        "fc1_b": u(ks[5], (FC1_SIZE,), k_fc1),
        "fc_w": u(ks[6], (NUM_CLASSES, FC1_SIZE), k_fc),
        "fc_b": u(ks[7], (NUM_CLASSES,), k_fc),
    }


def reference_forward(x, params):
    """Pure-JAX reference matching PyTorch LSTM semantics, for verification."""
    B, T, I = x.shape
    H = HIDDEN_SIZE
    h = jnp.zeros((B, H), jnp.float32)
    c = jnp.zeros((B, H), jnp.float32)
    for t in range(T):
        gates = (x[:, t, :] @ params["w_ih"].T + params["b_ih"]
                 + h @ params["w_hh"].T + params["b_hh"])
        i_g = jax.nn.sigmoid(gates[:, 0 * H:1 * H])
        f_g = jax.nn.sigmoid(gates[:, 1 * H:2 * H])
        g_g = jnp.tanh(gates[:, 2 * H:3 * H])
        o_g = jax.nn.sigmoid(gates[:, 3 * H:4 * H])
        c = f_g * c + i_g * g_g
        h = o_g * jnp.tanh(c)
    out = jnp.maximum(h, 0.0)
    out = jnp.maximum(out @ params["fc1_w"].T + params["fc1_b"], 0.0)
    return out @ params["fc_w"].T + params["fc_b"]


if __name__ == "__main__":
    key = jax.random.PRNGKey(0)
    k_x, k_p = jax.random.split(key)

    batch, seq_len = 2, 8
    x = jax.random.normal(k_x, (batch, seq_len, INPUT_SIZE), jnp.float32)
    params = init_params(k_p)

    out = lstm_module_forward(x, params)
    out = jax.block_until_ready(out)

    ref = reference_forward(x, params)
    assert out.shape == (batch, NUM_CLASSES)
    assert jnp.allclose(out, ref, atol=1e-4, rtol=1e-4), (out, ref)

    print("KERNEL_OK")
</pallas_src>

<mosaic_0001>
module attributes {stable_mosaic.version = 11 : i64} {
  func.func @kernel(%arg0: memref<25x128xf32, #tpu.memory_space<vmem>>, %arg1: memref<2x1xf32, #tpu.memory_space<vmem>>) attributes {dimension_semantics = [], scalar_prefetch = 0 : i64, scratch_operands = 0 : i64, tpu.core_type = #tpu.core_type<tc>} {
    %c0 = arith.constant 0 : index
    %c0_0 = arith.constant 0 : index
    %0 = vector.load %arg0[%c0, %c0_0] : memref<25x128xf32, #tpu.memory_space<vmem>>, vector<16x1xf32>
    %c16 = arith.constant 16 : index
    %c0_1 = arith.constant 0 : index
    %1 = vector.load %arg0[%c16, %c0_1] : memref<25x128xf32, #tpu.memory_space<vmem>>, vector<1x8xf32>
    %c17 = arith.constant 17 : index
    %c0_2 = arith.constant 0 : index
    %2 = vector.load %arg0[%c17, %c0_2] : memref<25x128xf32, #tpu.memory_space<vmem>>, vector<1x8xf32>
    %c18 = arith.constant 18 : index
    %c0_3 = arith.constant 0 : index
    %3 = vector.load %arg0[%c18, %c0_3] : memref<25x128xf32, #tpu.memory_space<vmem>>, vector<1x8xf32>
    %4 = vector.shape_cast %3 : vector<1x8xf32> to vector<1x8xf32>
    %5 = vector.broadcast %4 : vector<1x8xf32> to vector<2x8xf32>
    %c19 = arith.constant 19 : index
    %c0_4 = arith.constant 0 : index
    %6 = vector.load %arg0[%c19, %c0_4] : memref<25x128xf32, #tpu.memory_space<vmem>>, vector<1x8xf32>
    %7 = vector.shape_cast %6 : vector<1x8xf32> to vector<1x8xf32>
    %8 = vector.broadcast %7 : vector<1x8xf32> to vector<2x8xf32>
    %9 = vector.broadcast %0 : vector<16x1xf32> to vector<16x8xf32>
    %10 = vector.broadcast %1 : vector<1x8xf32> to vector<16x8xf32>
    %11 = arith.mulf %9, %10 : vector<16x8xf32>
    %12 = vector.broadcast %2 : vector<1x8xf32> to vector<16x8xf32>
    %13 = arith.addf %11, %12 : vector<16x8xf32>
    %14 = tpu.iota {dimensions = array<i32: 1>} : vector<2x8xi32>
    %c4_i32 = arith.constant 4 : i32
    %15 = vector.broadcast %c4_i32 : i32 to vector<2x8xi32>
    %16 = arith.cmpi sge, %14, %15 : vector<2x8xi32>
    %c6_i32 = arith.constant 6 : i32
    %17 = vector.broadcast %c6_i32 : i32 to vector<2x8xi32>
    %18 = arith.cmpi slt, %14, %17 : vector<2x8xi32>
    %19 = arith.andi %16, %18 : vector<2x8xi1>
    %cst = arith.constant 1.000000e+00 : f32
    %cst_5 = arith.constant 5.000000e-01 : f32
    %20 = vector.broadcast %cst : f32 to vector<2x8xf32>
    %21 = vector.broadcast %cst_5 : f32 to vector<2x8xf32>
    %22 = arith.select %19, %20, %21 : vector<2x8xi1>, vector<2x8xf32>
    %cst_6 = arith.constant 0.000000e+00 : f32
    %cst_7 = arith.constant 5.000000e-01 : f32
    %23 = vector.broadcast %cst_6 : f32 to vector<2x8xf32>
    %24 = vector.broadcast %cst_7 : f32 to vector<2x8xf32>
    %25 = arith.select %19, %23, %24 : vector<2x8xi1>, vector<2x8xf32>
    %cst_8 = arith.constant 0.000000e+00 : f32
    %26 = vector.broadcast %cst_8 : f32 to vector<2x2xf32>
    %cst_9 = arith.constant 0.000000e+00 : f32
    %27 = vector.broadcast %cst_9 : f32 to vector<2x2xf32>
    %28 = vector.extract_strided_slice %13 {offsets = [0, 0], sizes = [2, 8], strides = [1, 1]} : vector<16x8xf32> to vector<2x8xf32>
    %29 = vector.extract_strided_slice %26 {offsets = [0, 0], sizes = [2, 1], strides = [1, 1]} : vector<2x2xf32> to vector<2x1xf32>
    %30 = vector.broadcast %29 : vector<2x1xf32> to vector<2x8xf32>
    %31 = arith.mulf %30, %5 : vector<2x8xf32>
    %32 = arith.addf %28, %31 : vector<2x8xf32>
    %33 = vector.extract_strided_slice %26 {offsets = [0, 1], sizes = [2, 1], strides = [1, 1]} : vector<2x2xf32> to vector<2x1xf32>
    %34 = vector.broadcast %33 : vector<2x1xf32> to vector<2x8xf32>
    %35 = arith.mulf %34, %8 : vector<2x8xf32>
    %36 = arith.addf %32, %35 : vector<2x8xf32>
    %37 = arith.mulf %36, %22 : vector<2x8xf32>
    %38 = math.tanh %37 : vector<2x8xf32>
    %39 = arith.mulf %38, %22 : vector<2x8xf32>
    %40 = arith.addf %39, %25 : vector<2x8xf32>
    %41 = vector.extract_strided_slice %40 {offsets = [0, 0], sizes = [2, 2], strides = [1, 1]} : vector<2x8xf32> to vector<2x2xf32>
    %42 = vector.extract_strided_slice %40 {offsets = [0, 2], sizes = [2, 2], strides = [1, 1]} : vector<2x8xf32> to vector<2x2xf32>
    %43 = vector.extract_strided_slice %40 {offsets = [0, 4], sizes = [2, 2], strides = [1, 1]} : vector<2x8xf32> to vector<2x2xf32>
    %44 = vector.extract_strided_slice %40 {offsets = [0, 6], sizes = [2, 2], strides = [1, 1]} : vector<2x8xf32> to vector<2x2xf32>
    %45 = arith.mulf %42, %27 : vector<2x2xf32>
    %46 = arith.mulf %41, %43 : vector<2x2xf32>
    %47 = arith.addf %45, %46 : vector<2x2xf32>
    %48 = math.tanh %47 : vector<2x2xf32>
    %49 = arith.mulf %44, %48 : vector<2x2xf32>
    %50 = vector.extract_strided_slice %13 {offsets = [2, 0], sizes = [2, 8], strides = [1, 1]} : vector<16x8xf32> to vector<2x8xf32>
    %51 = vector.extract_strided_slice %49 {offsets = [0, 0], sizes = [2, 1], strides = [1, 1]} : vector<2x2xf32> to vector<2x1xf32>
    %52 = vector.broadcast %51 : vector<2x1xf32> to vector<2x8xf32>
    %53 = arith.mulf %52, %5 : vector<2x8xf32>
    %54 = arith.addf %50, %53 : vector<2x8xf32>
    %55 = vector.extract_strided_slice %49 {offsets = [0, 1], sizes = [2, 1], strides = [1, 1]} : vector<2x2xf32> to vector<2x1xf32>
    %56 = vector.broadcast %55 : vector<2x1xf32> to vector<2x8xf32>
    %57 = arith.mulf %56, %8 : vector<2x8xf32>
    %58 = arith.addf %54, %57 : vector<2x8xf32>
    %59 = arith.mulf %58, %22 : vector<2x8xf32>
    %60 = math.tanh %59 : vector<2x8xf32>
    %61 = arith.mulf %60, %22 : vector<2x8xf32>
    %62 = arith.addf %61, %25 : vector<2x8xf32>
    %63 = vector.extract_strided_slice %62 {offsets = [0, 0], sizes = [2, 2], strides = [1, 1]} : vector<2x8xf32> to vector<2x2xf32>
    %64 = vector.extract_strided_slice %62 {offsets = [0, 2], sizes = [2, 2], strides = [1, 1]} : vector<2x8xf32> to vector<2x2xf32>
    %65 = vector.extract_strided_slice %62 {offsets = [0, 4], sizes = [2, 2], strides = [1, 1]} : vector<2x8xf32> to vector<2x2xf32>
    %66 = vector.extract_strided_slice %62 {offsets = [0, 6], sizes = [2, 2], strides = [1, 1]} : vector<2x8xf32> to vector<2x2xf32>
    %67 = arith.mulf %64, %47 : vector<2x2xf32>
    %68 = arith.mulf %63, %65 : vector<2x2xf32>
    %69 = arith.addf %67, %68 : vector<2x2xf32>
    %70 = math.tanh %69 : vector<2x2xf32>
    %71 = arith.mulf %66, %70 : vector<2x2xf32>
    %72 = vector.extract_strided_slice %13 {offsets = [4, 0], sizes = [2, 8], strides = [1, 1]} : vector<16x8xf32> to vector<2x8xf32>
    %73 = vector.extract_strided_slice %71 {offsets = [0, 0], sizes = [2, 1], strides = [1, 1]} : vector<2x2xf32> to vector<2x1xf32>
    %74 = vector.broadcast %73 : vector<2x1xf32> to vector<2x8xf32>
    %75 = arith.mulf %74, %5 : vector<2x8xf32>
    %76 = arith.addf %72, %75 : vector<2x8xf32>
    %77 = vector.extract_strided_slice %71 {offsets = [0, 1], sizes = [2, 1], strides = [1, 1]} : vector<2x2xf32> to vector<2x1xf32>
    %78 = vector.broadcast %77 : vector<2x1xf32> to vector<2x8xf32>
    %79 = arith.mulf %78, %8 : vector<2x8xf32>
    %80 = arith.addf %76, %79 : vector<2x8xf32>
    %81 = arith.mulf %80, %22 : vector<2x8xf32>
    %82 = math.tanh %81 : vector<2x8xf32>
    %83 = arith.mulf %82, %22 : vector<2x8xf32>
    %84 = arith.addf %83, %25 : vector<2x8xf32>
    %85 = vector.extract_strided_slice %84 {offsets = [0, 0], sizes = [2, 2], strides = [1, 1]} : vector<2x8xf32> to vector<2x2xf32>
    %86 = vector.extract_strided_slice %84 {offsets = [0, 2], sizes = [2, 2], strides = [1, 1]} : vector<2x8xf32> to vector<2x2xf32>
    %87 = vector.extract_strided_slice %84 {offsets = [0, 4], sizes = [2, 2], strides = [1, 1]} : vector<2x8xf32> to vector<2x2xf32>
    %88 = vector.extract_strided_slice %84 {offsets = [0, 6], sizes = [2, 2], strides = [1, 1]} : vector<2x8xf32> to vector<2x2xf32>
    %89 = arith.mulf %86, %69 : vector<2x2xf32>
    %90 = arith.mulf %85, %87 : vector<2x2xf32>
    %91 = arith.addf %89, %90 : vector<2x2xf32>
    %92 = math.tanh %91 : vector<2x2xf32>
    %93 = arith.mulf %88, %92 : vector<2x2xf32>
    %94 = vector.extract_strided_slice %13 {offsets = [6, 0], sizes = [2, 8], strides = [1, 1]} : vector<16x8xf32> to vector<2x8xf32>
    %95 = vector.extract_strided_slice %93 {offsets = [0, 0], sizes = [2, 1], strides = [1, 1]} : vector<2x2xf32> to vector<2x1xf32>
    %96 = vector.broadcast %95 : vector<2x1xf32> to vector<2x8xf32>
    %97 = arith.mulf %96, %5 : vector<2x8xf32>
    %98 = arith.addf %94, %97 : vector<2x8xf32>
    %99 = vector.extract_strided_slice %93 {offsets = [0, 1], sizes = [2, 1], strides = [1, 1]} : vector<2x2xf32> to vector<2x1xf32>
    %100 = vector.broadcast %99 : vector<2x1xf32> to vector<2x8xf32>
    %101 = arith.mulf %100, %8 : vector<2x8xf32>
    %102 = arith.addf %98, %101 : vector<2x8xf32>
    %103 = arith.mulf %102, %22 : vector<2x8xf32>
    %104 = math.tanh %103 : vector<2x8xf32>
    %105 = arith.mulf %104, %22 : vector<2x8xf32>
    %106 = arith.addf %105, %25 : vector<2x8xf32>
    %107 = vector.extract_strided_slice %106 {offsets = [0, 0], sizes = [2, 2], strides = [1, 1]} : vector<2x8xf32> to vector<2x2xf32>
    %108 = vector.extract_strided_slice %106 {offsets = [0, 2], sizes = [2, 2], strides = [1, 1]} : vector<2x8xf32> to vector<2x2xf32>
    %109 = vector.extract_strided_slice %106 {offsets = [0, 4], sizes = [2, 2], strides = [1, 1]} : vector<2x8xf32> to vector<2x2xf32>
    %110 = vector.extract_strided_slice %106 {offsets = [0, 6], sizes = [2, 2], strides = [1, 1]} : vector<2x8xf32> to vector<2x2xf32>
    %111 = arith.mulf %108, %91 : vector<2x2xf32>
    %112 = arith.mulf %107, %109 : vector<2x2xf32>
    %113 = arith.addf %111, %112 : vector<2x2xf32>
    %114 = math.tanh %113 : vector<2x2xf32>
    %115 = arith.mulf %110, %114 : vector<2x2xf32>
    %116 = vector.extract_strided_slice %13 {offsets = [8, 0], sizes = [2, 8], strides = [1, 1]} : vector<16x8xf32> to vector<2x8xf32>
    %117 = vector.extract_strided_slice %115 {offsets = [0, 0], sizes = [2, 1], strides = [1, 1]} : vector<2x2xf32> to vector<2x1xf32>
    %118 = vector.broadcast %117 : vector<2x1xf32> to vector<2x8xf32>
    %119 = arith.mulf %118, %5 : vector<2x8xf32>
    %120 = arith.addf %116, %119 : vector<2x8xf32>
    %121 = vector.extract_strided_slice %115 {offsets = [0, 1], sizes = [2, 1], strides = [1, 1]} : vector<2x2xf32> to vector<2x1xf32>
    %122 = vector.broadcast %121 : vector<2x1xf32> to vector<2x8xf32>
    %123 = arith.mulf %122, %8 : vector<2x8xf32>
    %124 = arith.addf %120, %123 : vector<2x8xf32>
    %125 = arith.mulf %124, %22 : vector<2x8xf32>
    %126 = math.tanh %125 : vector<2x8xf32>
    %127 = arith.mulf %126, %22 : vector<2x8xf32>
    %128 = arith.addf %127, %25 : vector<2x8xf32>
    %129 = vector.extract_strided_slice %128 {offsets = [0, 0], sizes = [2, 2], strides = [1, 1]} : vector<2x8xf32> to vector<2x2xf32>
    %130 = vector.extract_strided_slice %128 {offsets = [0, 2], sizes = [2, 2], strides = [1, 1]} : vector<2x8xf32> to vector<2x2xf32>
    %131 = vector.extract_strided_slice %128 {offsets = [0, 4], sizes = [2, 2], strides = [1, 1]} : vector<2x8xf32> to vector<2x2xf32>
    %132 = vector.extract_strided_slice %128 {offsets = [0, 6], sizes = [2, 2], strides = [1, 1]} : vector<2x8xf32> to vector<2x2xf32>
    %133 = arith.mulf %130, %113 : vector<2x2xf32>
    %134 = arith.mulf %129, %131 : vector<2x2xf32>
    %135 = arith.addf %133, %134 : vector<2x2xf32>
    %136 = math.tanh %135 : vector<2x2xf32>
    %137 = arith.mulf %132, %136 : vector<2x2xf32>
    %138 = vector.extract_strided_slice %13 {offsets = [10, 0], sizes = [2, 8], strides = [1, 1]} : vector<16x8xf32> to vector<2x8xf32>
    %139 = vector.extract_strided_slice %137 {offsets = [0, 0], sizes = [2, 1], strides = [1, 1]} : vector<2x2xf32> to vector<2x1xf32>
    %140 = vector.broadcast %139 : vector<2x1xf32> to vector<2x8xf32>
    %141 = arith.mulf %140, %5 : vector<2x8xf32>
    %142 = arith.addf %138, %141 : vector<2x8xf32>
    %143 = vector.extract_strided_slice %137 {offsets = [0, 1], sizes = [2, 1], strides = [1, 1]} : vector<2x2xf32> to vector<2x1xf32>
    %144 = vector.broadcast %143 : vector<2x1xf32> to vector<2x8xf32>
    %145 = arith.mulf %144, %8 : vector<2x8xf32>
    %146 = arith.addf %142, %145 : vector<2x8xf32>
    %147 = arith.mulf %146, %22 : vector<2x8xf32>
    %148 = math.tanh %147 : vector<2x8xf32>
    %149 = arith.mulf %148, %22 : vector<2x8xf32>
    %150 = arith.addf %149, %25 : vector<2x8xf32>
    %151 = vector.extract_strided_slice %150 {offsets = [0, 0], sizes = [2, 2], strides = [1, 1]} : vector<2x8xf32> to vector<2x2xf32>
    %152 = vector.extract_strided_slice %150 {offsets = [0, 2], sizes = [2, 2], strides = [1, 1]} : vector<2x8xf32> to vector<2x2xf32>
    %153 = vector.extract_strided_slice %150 {offsets = [0, 4], sizes = [2, 2], strides = [1, 1]} : vector<2x8xf32> to vector<2x2xf32>
    %154 = vector.extract_strided_slice %150 {offsets = [0, 6], sizes = [2, 2], strides = [1, 1]} : vector<2x8xf32> to vector<2x2xf32>
    %155 = arith.mulf %152, %135 : vector<2x2xf32>
    %156 = arith.mulf %151, %153 : vector<2x2xf32>
    %157 = arith.addf %155, %156 : vector<2x2xf32>
    %158 = math.tanh %157 : vector<2x2xf32>
    %159 = arith.mulf %154, %158 : vector<2x2xf32>
    %160 = vector.extract_strided_slice %13 {offsets = [12, 0], sizes = [2, 8], strides = [1, 1]} : vector<16x8xf32> to vector<2x8xf32>
    %161 = vector.extract_strided_slice %159 {offsets = [0, 0], sizes = [2, 1], strides = [1, 1]} : vector<2x2xf32> to vector<2x1xf32>
    %162 = vector.broadcast %161 : vector<2x1xf32> to vector<2x8xf32>
    %163 = arith.mulf %162, %5 : vector<2x8xf32>
    %164 = arith.addf %160, %163 : vector<2x8xf32>
    %165 = vector.extract_strided_slice %159 {offsets = [0, 1], sizes = [2, 1], strides = [1, 1]} : vector<2x2xf32> to vector<2x1xf32>
    %166 = vector.broadcast %165 : vector<2x1xf32> to vector<2x8xf32>
    %167 = arith.mulf %166, %8 : vector<2x8xf32>
    %168 = arith.addf %164, %167 : vector<2x8xf32>
    %169 = arith.mulf %168, %22 : vector<2x8xf32>
    %170 = math.tanh %169 : vector<2x8xf32>
    %171 = arith.mulf %170, %22 : vector<2x8xf32>
    %172 = arith.addf %171, %25 : vector<2x8xf32>
    %173 = vector.extract_strided_slice %172 {offsets = [0, 0], sizes = [2, 2], strides = [1, 1]} : vector<2x8xf32> to vector<2x2xf32>
    %174 = vector.extract_strided_slice %172 {offsets = [0, 2], sizes = [2, 2], strides = [1, 1]} : vector<2x8xf32> to vector<2x2xf32>
    %175 = vector.extract_strided_slice %172 {offsets = [0, 4], sizes = [2, 2], strides = [1, 1]} : vector<2x8xf32> to vector<2x2xf32>
    %176 = vector.extract_strided_slice %172 {offsets = [0, 6], sizes = [2, 2], strides = [1, 1]} : vector<2x8xf32> to vector<2x2xf32>
    %177 = arith.mulf %174, %157 : vector<2x2xf32>
    %178 = arith.mulf %173, %175 : vector<2x2xf32>
    %179 = arith.addf %177, %178 : vector<2x2xf32>
    %180 = math.tanh %179 : vector<2x2xf32>
    %181 = arith.mulf %176, %180 : vector<2x2xf32>
    %182 = vector.extract_strided_slice %13 {offsets = [14, 0], sizes = [2, 8], strides = [1, 1]} : vector<16x8xf32> to vector<2x8xf32>
    %183 = vector.extract_strided_slice %181 {offsets = [0, 0], sizes = [2, 1], strides = [1, 1]} : vector<2x2xf32> to vector<2x1xf32>
    %184 = vector.broadcast %183 : vector<2x1xf32> to vector<2x8xf32>
    %185 = arith.mulf %184, %5 : vector<2x8xf32>
    %186 = arith.addf %182, %185 : vector<2x8xf32>
    %187 = vector.extract_strided_slice %181 {offsets = [0, 1], sizes = [2, 1], strides = [1, 1]} : vector<2x2xf32> to vector<2x1xf32>
    %188 = vector.broadcast %187 : vector<2x1xf32> to vector<2x8xf32>
    %189 = arith.mulf %188, %8 : vector<2x8xf32>
    %190 = arith.addf %186, %189 : vector<2x8xf32>
    %191 = arith.mulf %190, %22 : vector<2x8xf32>
    %192 = math.tanh %191 : vector<2x8xf32>
    %193 = arith.mulf %192, %22 : vector<2x8xf32>
    %194 = arith.addf %193, %25 : vector<2x8xf32>
    %195 = vector.extract_strided_slice %194 {offsets = [0, 0], sizes = [2, 2], strides = [1, 1]} : vector<2x8xf32> to vector<2x2xf32>
    %196 = vector.extract_strided_slice %194 {offsets = [0, 2], sizes = [2, 2], strides = [1, 1]} : vector<2x8xf32> to vector<2x2xf32>
    %197 = vector.extract_strided_slice %194 {offsets = [0, 4], sizes = [2, 2], strides = [1, 1]} : vector<2x8xf32> to vector<2x2xf32>
    %198 = vector.extract_strided_slice %194 {offsets = [0, 6], sizes = [2, 2], strides = [1, 1]} : vector<2x8xf32> to vector<2x2xf32>
    %199 = arith.mulf %196, %179 : vector<2x2xf32>
    %200 = arith.mulf %195, %197 : vector<2x2xf32>
    %201 = arith.addf %199, %200 : vector<2x2xf32>
    %202 = math.tanh %201 : vector<2x2xf32>
    %203 = arith.mulf %198, %202 : vector<2x2xf32>
    %cst_10 = arith.constant 0.000000e+00 : f32
    %204 = vector.broadcast %cst_10 : f32 to vector<2x2xf32>
    %205 = arith.maximumf %203, %204 : vector<2x2xf32>
    %c22 = arith.constant 22 : index
    %c0_11 = arith.constant 0 : index
    %206 = vector.load %arg0[%c22, %c0_11] : memref<25x128xf32, #tpu.memory_space<vmem>>, vector<1x128xf32>
    %207 = vector.shape_cast %206 : vector<1x128xf32> to vector<1x128xf32>
    %208 = vector.broadcast %207 : vector<1x128xf32> to vector<2x128xf32>
    %209 = vector.extract_strided_slice %205 {offsets = [0, 0], sizes = [2, 1], strides = [1, 1]} : vector<2x2xf32> to vector<2x1xf32>
    %c20 = arith.constant 20 : index
    %c0_12 = arith.constant 0 : index
    %210 = vector.load %arg0[%c20, %c0_12] : memref<25x128xf32, #tpu.memory_space<vmem>>, vector<1x128xf32>
    %211 = vector.broadcast %209 : vector<2x1xf32> to vector<2x128xf32>
    %212 = vector.broadcast %210 : vector<1x128xf32> to vector<2x128xf32>
    %213 = arith.mulf %211, %212 : vector<2x128xf32>
    %214 = arith.addf %208, %213 : vector<2x128xf32>
    %215 = vector.extract_strided_slice %205 {offsets = [0, 1], sizes = [2, 1], strides = [1, 1]} : vector<2x2xf32> to vector<2x1xf32>
    %c21 = arith.constant 21 : index
    %c0_13 = arith.constant 0 : index
    %216 = vector.load %arg0[%c21, %c0_13] : memref<25x128xf32, #tpu.memory_space<vmem>>, vector<1x128xf32>
    %217 = vector.broadcast %215 : vector<2x1xf32> to vector<2x128xf32>
    %218 = vector.broadcast %216 : vector<1x128xf32> to vector<2x128xf32>
    %219 = arith.mulf %217, %218 : vector<2x128xf32>
    %220 = arith.addf %214, %219 : vector<2x128xf32>
    %cst_14 = arith.constant 0.000000e+00 : f32
    %221 = vector.broadcast %cst_14 : f32 to vector<2x128xf32>
    %222 = arith.maximumf %220, %221 : vector<2x128xf32>
    %c23 = arith.constant 23 : index
    %c0_15 = arith.constant 0 : index
    %223 = vector.load %arg0[%c23, %c0_15] : memref<25x128xf32, #tpu.memory_space<vmem>>, vector<1x128xf32>
    %c24 = arith.constant 24 : index
    %c0_16 = arith.constant 0 : index
    %224 = vector.load %arg0[%c24, %c0_16] : memref<25x128xf32, #tpu.memory_space<vmem>>, vector<1x1xf32>
    %225 = vector.broadcast %223 : vector<1x128xf32> to vector<2x128xf32>
    %226 = arith.mulf %222, %225 : vector<2x128xf32>
    %cst_17 = arith.constant dense<0.000000e+00> : vector<2xf32>
    %227 = vector.multi_reduction <add>, %226, %cst_17 [1] : vector<2x128xf32> to vector<2xf32>
    %228 = vector.shape_cast %227 : vector<2xf32> to vector<2x1xf32>
    %229 = vector.broadcast %224 : vector<1x1xf32> to vector<2x1xf32>
    %230 = arith.addf %228, %229 : vector<2x1xf32>
    %c0_18 = arith.constant 0 : index
    %c0_19 = arith.constant 0 : index
    %231 = vector.load %arg1[%c0_18, %c0_19] : memref<2x1xf32, #tpu.memory_space<vmem>>, vector<2x1xf32>
    tpu.vector_store %arg1[%c0_18, %c0_19], %230 {strides = array<i32>} : memref<2x1xf32, #tpu.memory_space<vmem>>, vector<2x1xf32>,
    return
  }
}

</mosaic_0001>

<llo_original>
// kernel: tpu_custom_call.1
$region0: #{tpu_custom_call.1}
  #allocation0 [shape = 'u32[]', space=smem, size = 0x4, offset = 0x4, fixed_abs, tag = 'smem constant byte address 0x4 - core index']
  #allocation1 [shape = 'u32[144,128]{1,0:T(1,128)}', space=vmem, size = 0x12000, scoped, tag = 'internal scratch']
  %s0 = inlined_call_operand.hbm [shape: f32[25,128], index: 0, kind: input, shape index: {}]
  %s1 = inlined_call_operand.vmem [shape: f32[2,1], index: 1, kind: output, shape index: {}]
  %s2 = sld [smem:[#allocation0]]
  $region18: #{tpu_custom_call.1} parent=0
    _
  %s4 = ssub.s32 1, %s2
  %s5 = scalar_select 0, %s4, %s2
  $region1: #{tpu_custom_call.1} parent=0
    #allocation2 [shape = 'u8[16384]{0}', space=vmem, size = 0x4000, scoped, tag = 'input window, operand 0, single buffered']
    #allocation3 [shape = 's32[1]{0}', space=sflag, size = 0x4, scoped, tag = 'scoped memory for tpu_custom_call.1']
    %6 = vsyncpa [#allocation3], 0
    // Predicated region
    $region2: #{tpu_custom_call.1} parent=1 // pred_check
      _
    $region3: #{tpu_custom_call.1} parent=1 // pred_check_branch
      %8 = sbr.rel (0) target = $region5
    $region4: #{tpu_custom_call.1} parent=1 // pred_region
      %s10 = ssub.s32 512, 512
      %11 = vsyncadd [#allocation3], %s10
      %s12 = sshll.u32 [#allocation2], 4
      %s13 = int_to_ptr.vmem [resolvable:$true] %s12
      %18 = dma.hbm_to_vmem [thread:$0]  %s0, 512, %s13, [#allocation3], 128, 128, 8
    $region5: #{tpu_custom_call.1} parent=1 // pred_fallthru
      _
    // Predicated region
    $region6: #{tpu_custom_call.1} parent=1 // pred_check
      _
    $region7: #{tpu_custom_call.1} parent=1 // pred_check_branch
      %20 = sbr.rel (0) target = $region9
    $region8: #{tpu_custom_call.1} parent=1 // pred_region
      %21 = dma.done [#allocation3], 512
    $region9: #{tpu_custom_call.1} parent=1 // pred_fallthru
      _
    %v22 = vld [vmem:[#allocation2] sm:$0xff]
    %v23 = vld [vmem:[#allocation2 + $0x8] sm:$0xff]
    %v24 = vld [vmem:[#allocation2 + $0x10] sm:$0x1]
    %v25 = vld [vmem:[#allocation2 + $0x11] sm:$0x1]
    %v26 = vld [vmem:[#allocation2 + $0x12] sm:$0x1]
    %v27 = vlaneseq
    %v28 = vshrl.u32 %v27, 7
    %v29 = vsub.s32 0, %v28
    %v30 = vrot.slane %v26, %v29
    %v31 = vld [vmem:[#allocation2 + $0x13] sm:$0x1]
    %v32 = vlaneseq
    %v33 = vshrl.u32 %v32, 7
    %v34 = vsub.s32 0, %v33
    %v35 = vrot.slane %v31, %v34
    %37 = vset.pattern.permute.xlu0 0
    %38 = vperm.xlu0 %37, %v22
    %v39 = vpop.permute.xlu0 %38
    %42 = vset.pattern.permute.xlu0 0
    %43 = vperm.xlu0 %42, %v23
    %v44 = vpop.permute.xlu0 %43
    %v46 = vlaneseq
    %v47 = vshrl.u32 %v46, 7
    %v48 = vsub.s32 0, %v47
    %v49 = vrot.slane %v24, %v48
    %v50 = vmul.f32 %v39, %v49
    %v51 = vmul.f32 %v44, %v49
    %v52 = vlaneseq
    %v53 = vshrl.u32 %v52, 7
    %v54 = vsub.s32 0, %v53
    %v55 = vrot.slane %v25, %v54
    %v56 = vadd.f32 %v50, %v55
    %v57 = vadd.f32 %v51, %v55
    %v58 = vlaneseq
    %v59 = vand.u32 %v58, 127
    %vm60 = vcmp.ge.s32.totalorder %v59, 4
    %vm61 = vcmp.lt.s32.totalorder %v59, 6
    %vm62 = vmand %vm60, %vm61
    %v63 = vsel %vm62, 1.0, 0.5
    %v64 = vsel %vm62, 0.0, 0.5
    %v65 = vmul.f32 %v30, 0.0
    %v66 = vadd.f32 %v56, %v65
    %v67 = vmul.f32 %v35, 0.0
    %v68 = vadd.f32 %v66, %v67
    %v69 = vmul.f32 %v68, %v63
    %v70 = vtanh.pop %v69
    %v71 = vmul.f32 %v70, %v63
    %v72 = vadd.f32 %v71, %v64
    %v73 = vmul.f32 %v72, 0.0
    %75 = vrot.lane.b32.xlu0 %v72, 124
    %v76 = vpop.permute.xlu0 %75
    %v78 = vmul.f32 %v72, %v76
    %80 = vrot.lane.b32.xlu0 %v78, 2
    %v81 = vpop.permute.xlu0 %80
    %v83 = vadd.f32 %v73, %v81
    %v84 = vtanh.pop %v83
    %86 = vrot.lane.b32.xlu0 %v84, 4
    %v87 = vpop.permute.xlu0 %86
    %v89 = vmul.f32 %v72, %v87
    %91 = vset.pattern.permute.xlu0 6
    %92 = vperm.xlu0 %91, %v89
    %v93 = vpop.permute.xlu0 %92
    %v95 = vmul.f32 %v93, %v30
    %v97 = vrot.slane %v95, 6
    %v99 = vadd.f32 %v56, %v97
    %100 = vset.pattern.permute.xlu0 7
    %101 = vperm.xlu0 %100, %v89
    %v102 = vpop.permute.xlu0 %101
    %v104 = vmul.f32 %v102, %v35
    %v106 = vrot.slane %v104, 6
    %v108 = vadd.f32 %v99, %v106
    %v109 = vmul.f32 %v108, %v63
    %v110 = vtanh.pop %v109
    %v111 = vmul.f32 %v110, %v63
    %v112 = vadd.f32 %v111, %v64
    %v114 = vrot.slane %v83, 6
    %v116 = vmul.f32 %v112, %v114
    %118 = vrot.lane.b32.xlu0 %v112, 124
    %v119 = vpop.permute.xlu0 %118
    %v121 = vmul.f32 %v112, %v119
    %123 = vrot.lane.b32.xlu0 %v121, 2
    %v124 = vpop.permute.xlu0 %123
    %v126 = vadd.f32 %v116, %v124
    %v127 = vtanh.pop %v126
    %129 = vrot.lane.b32.xlu0 %v127, 4
    %v130 = vpop.permute.xlu0 %129
    %v132 = vmul.f32 %v112, %v130
    %134 = vset.pattern.permute.xlu0 6
    %135 = vperm.xlu0 %134, %v132
    %v136 = vpop.permute.xlu0 %135
    %v138 = vmul.f32 %v136, %v30
    %v140 = vrot.slane %v138, 6
    %v142 = vadd.f32 %v56, %v140
    %143 = vset.pattern.permute.xlu0 7
    %144 = vperm.xlu0 %143, %v132
    %v145 = vpop.permute.xlu0 %144
    %v147 = vmul.f32 %v145, %v35
    %v149 = vrot.slane %v147, 6
    %v151 = vadd.f32 %v142, %v149
    %v152 = vmul.f32 %v151, %v63
    %v153 = vtanh.pop %v152
    %v154 = vmul.f32 %v153, %v63
    %v155 = vadd.f32 %v154, %v64
    %v157 = vrot.slane %v126, 6
    %v159 = vmul.f32 %v155, %v157
    %161 = vrot.lane.b32.xlu0 %v155, 124
    %v162 = vpop.permute.xlu0 %161
    %v164 = vmul.f32 %v155, %v162
    %166 = vrot.lane.b32.xlu0 %v164, 2
    %v167 = vpop.permute.xlu0 %166
    %v169 = vadd.f32 %v159, %v167
    %v170 = vtanh.pop %v169
    %172 = vrot.lane.b32.xlu0 %v170, 4
    %v173 = vpop.permute.xlu0 %172
    %v175 = vmul.f32 %v155, %v173
    %177 = vset.pattern.permute.xlu0 6
    %178 = vperm.xlu0 %177, %v175
    %v179 = vpop.permute.xlu0 %178
    %v181 = vmul.f32 %v179, %v30
    %v183 = vrot.slane %v181, 6
    %v185 = vadd.f32 %v56, %v183
    %186 = vset.pattern.permute.xlu0 7
    %187 = vperm.xlu0 %186, %v175
    %v188 = vpop.permute.xlu0 %187
    %v190 = vmul.f32 %v188, %v35
    %v192 = vrot.slane %v190, 6
    %v194 = vadd.f32 %v185, %v192
    %v195 = vmul.f32 %v194, %v63
    %v196 = vtanh.pop %v195
    %v197 = vmul.f32 %v196, %v63
    %v198 = vadd.f32 %v197, %v64
    %v200 = vrot.slane %v169, 6
    %v202 = vmul.f32 %v198, %v200
    %204 = vrot.lane.b32.xlu0 %v198, 124
    %v205 = vpop.permute.xlu0 %204
    %v207 = vmul.f32 %v198, %v205
    %209 = vrot.lane.b32.xlu0 %v207, 2
    %v210 = vpop.permute.xlu0 %209
    %v212 = vadd.f32 %v202, %v210
    %v213 = vtanh.pop %v212
    %215 = vrot.lane.b32.xlu0 %v213, 4
    %v216 = vpop.permute.xlu0 %215
    %v218 = vmul.f32 %v198, %v216
    %220 = vset.pattern.permute.xlu0 6
    %221 = vperm.xlu0 %220, %v218
    %v222 = vpop.permute.xlu0 %221
    %v224 = vmul.f32 %v222, %v30
    %v226 = vrot.slane %v224, 6
    %v228 = vadd.f32 %v57, %v226
    %229 = vset.pattern.permute.xlu0 7
    %230 = vperm.xlu0 %229, %v218
    %v231 = vpop.permute.xlu0 %230
    %v233 = vmul.f32 %v231, %v35
    %v235 = vrot.slane %v233, 6
    %v237 = vadd.f32 %v228, %v235
    %v238 = vmul.f32 %v237, %v63
    %v239 = vtanh.pop %v238
    %v240 = vmul.f32 %v239, %v63
    %v241 = vadd.f32 %v240, %v64
    %v243 = vrot.slane %v212, 6
    %v245 = vmul.f32 %v241, %v243
    %247 = vrot.lane.b32.xlu0 %v241, 124
    %v248 = vpop.permute.xlu0 %247
    %v250 = vmul.f32 %v241, %v248
    %252 = vrot.lane.b32.xlu0 %v250, 2
    %v253 = vpop.permute.xlu0 %252
    %v255 = vadd.f32 %v245, %v253
    %v256 = vtanh.pop %v255
    %258 = vrot.lane.b32.xlu0 %v256, 4
    %v259 = vpop.permute.xlu0 %258
    %v261 = vmul.f32 %v241, %v259
    %263 = vset.pattern.permute.xlu0 6
    %264 = vperm.xlu0 %263, %v261
    %v265 = vpop.permute.xlu0 %264
    %v267 = vmul.f32 %v265, %v30
    %v269 = vrot.slane %v267, 6
    %v271 = vadd.f32 %v57, %v269
    %272 = vset.pattern.permute.xlu0 7
    %273 = vperm.xlu0 %272, %v261
    %v274 = vpop.permute.xlu0 %273
    %v276 = vmul.f32 %v274, %v35
    %v278 = vrot.slane %v276, 6
    %v280 = vadd.f32 %v271, %v278
    %v281 = vmul.f32 %v280, %v63
    %v282 = vtanh.pop %v281
    %v283 = vmul.f32 %v282, %v63
    %v284 = vadd.f32 %v283, %v64
    %v286 = vrot.slane %v255, 6
    %v288 = vmul.f32 %v284, %v286
    %290 = vrot.lane.b32.xlu0 %v284, 124
    %v291 = vpop.permute.xlu0 %290
    %v293 = vmul.f32 %v284, %v291
    %295 = vrot.lane.b32.xlu0 %v293, 2
    %v296 = vpop.permute.xlu0 %295
    %v298 = vadd.f32 %v288, %v296
    %v299 = vtanh.pop %v298
    %301 = vrot.lane.b32.xlu0 %v299, 4
    %v302 = vpop.permute.xlu0 %301
    %v304 = vmul.f32 %v284, %v302
    %306 = vset.pattern.permute.xlu0 6
    %307 = vperm.xlu0 %306, %v304
    %v308 = vpop.permute.xlu0 %307
    %v310 = vmul.f32 %v308, %v30
    %v312 = vrot.slane %v310, 6
    %v314 = vadd.f32 %v57, %v312
    %315 = vset.pattern.permute.xlu0 7
    %316 = vperm.xlu0 %315, %v304
    %v317 = vpop.permute.xlu0 %316
    %v319 = vmul.f32 %v317, %v35
    %v321 = vrot.slane %v319, 6
    %v323 = vadd.f32 %v314, %v321
    %v324 = vmul.f32 %v323, %v63
    %v325 = vtanh.pop %v324
    %v326 = vmul.f32 %v325, %v63
    %v327 = vadd.f32 %v326, %v64
    %v329 = vrot.slane %v298, 6
    %v331 = vmul.f32 %v327, %v329
    %333 = vrot.lane.b32.xlu0 %v327, 124
    %v334 = vpop.permute.xlu0 %333
    %v336 = vmul.f32 %v327, %v334
    %338 = vrot.lane.b32.xlu0 %v336, 2
    %v339 = vpop.permute.xlu0 %338
    %v341 = vadd.f32 %v331, %v339
    %v342 = vtanh.pop %v341
    %344 = vrot.lane.b32.xlu0 %v342, 4
    %v345 = vpop.permute.xlu0 %344
    %v347 = vmul.f32 %v327, %v345
    %349 = vset.pattern.permute.xlu0 6
    %350 = vperm.xlu0 %349, %v347
    %v351 = vpop.permute.xlu0 %350
    %v353 = vmul.f32 %v351, %v30
    %v355 = vrot.slane %v353, 6
    %v357 = vadd.f32 %v57, %v355
    %358 = vset.pattern.permute.xlu0 7
    %359 = vperm.xlu0 %358, %v347
    %v360 = vpop.permute.xlu0 %359
    %v362 = vmul.f32 %v360, %v35
    %v364 = vrot.slane %v362, 6
    %v366 = vadd.f32 %v357, %v364
    %v367 = vmul.f32 %v366, %v63
    %v368 = vtanh.pop %v367
    %v369 = vmul.f32 %v368, %v63
    %v370 = vadd.f32 %v369, %v64
    %v372 = vrot.slane %v341, 6
    %v374 = vmul.f32 %v370, %v372
    %376 = vrot.lane.b32.xlu0 %v370, 124
    %v377 = vpop.permute.xlu0 %376
    %v379 = vmul.f32 %v370, %v377
    %381 = vrot.lane.b32.xlu0 %v379, 2
    %v382 = vpop.permute.xlu0 %381
    %v384 = vadd.f32 %v374, %v382
    %v385 = vtanh.pop %v384
    %387 = vrot.lane.b32.xlu0 %v385, 4
    %v388 = vpop.permute.xlu0 %387
    %v390 = vmul.f32 %v370, %v388
    %v391 = vmax.f32 %v390, 0.0
    %v392 = vld [vmem:[#allocation2 + $0x16] sm:$0x1]
    %v393 = vlaneseq
    %v394 = vshrl.u32 %v393, 7
    %v395 = vsub.s32 0, %v394
    %v396 = vrot.slane %v392, %v395
    %v397 = vld [vmem:[#allocation2 + $0x14] sm:$0x1]
    %399 = vset.pattern.permute.xlu0 6
    %400 = vperm.xlu0 %399, %v391
    %v401 = vpop.permute.xlu0 %400
    %v403 = vlaneseq
    %v404 = vshrl.u32 %v403, 7
    %v405 = vsub.s32 0, %v404
    %v406 = vrot.slane %v397, %v405
    %v407 = vmul.f32 %v401, %v406
    %v408 = vadd.f32 %v396, %v407
    %v409 = vld [vmem:[#allocation2 + $0x15] sm:$0x1]
    %410 = vset.pattern.permute.xlu0 7
    %411 = vperm.xlu0 %410, %v391
    %v412 = vpop.permute.xlu0 %411
    %v414 = vlaneseq
    %v415 = vshrl.u32 %v414, 7
    %v416 = vsub.s32 0, %v415
    %v417 = vrot.slane %v409, %v416
    %v418 = vmul.f32 %v412, %v417
    %v419 = vadd.f32 %v408, %v418
    %v420 = vmax.f32 %v419, 0.0
    %v421 = vld [vmem:[#allocation2 + $0x17] sm:$0x1]
    %v422 = vld [vmem:[#allocation2 + $0x18] sm:$0x1]
    %v423 = vlaneseq
    %v424 = vshrl.u32 %v423, 7
    %v425 = vsub.s32 0, %v424
    %v426 = vrot.slane %v421, %v425
    %v427 = vmul.f32 %v420, %v426
    %vm428 = vcmask 1047558
    %v429 = vsel %vm428, %v427, 0.0
    %430 = vadd.xlane.f32.xlu0 %v429
    %v431 = vpop.xlane.xlu0 %430
    %v432 = vlaneseq
    %v433 = vshrl.u32 %v432, 7
    %v434 = vsub.s32 0, %v433
    %v435 = vrot.slane %v422, %v434
    %v436 = vadd.f32 %v431, %v435
    %vm437 = vcmask 7174
    %438 = vst.msk [vmem:[%s1 - $0x6] sm:$0xc0] %vm437, %v436
    // Predicated region
    $region10: #{tpu_custom_call.1} parent=1 // pred_check
      _
    $region11: #{tpu_custom_call.1} parent=1 // pred_check_branch
      %440 = sbr.rel (0) target = $region13
    $region12: #{tpu_custom_call.1} parent=1 // pred_region
      _
    $region13: #{tpu_custom_call.1} parent=1 // pred_fallthru
      _
    // Predicated region
    $region14: #{tpu_custom_call.1} parent=1 // pred_check
      _
    $region15: #{tpu_custom_call.1} parent=1 // pred_check_branch
      %442 = sbr.rel (0) target = $region17
    $region16: #{tpu_custom_call.1} parent=1 // pred_region
      _
    $region17: #{tpu_custom_call.1} parent=1 // pred_fallthru
      _
    %443 = vsyncpa [#allocation3], 1

</llo_original>
